<compile_context>
chip_gen: v6e
topology: v6e:2x2x1
jax: 0.10.0
libtpu: 0.0.40
codegen_flags: <defaults>
</compile_context>

<pallas_src>
import numpy as np
import jax
import jax.numpy as jnp
from jax.experimental import pallas as pl
from jax.experimental.pallas import tpu as pltpu


def _mha_head_kernel(x_ref, wq_ref, wk_ref, wv_ref, bq_ref, bk_ref, bv_ref,
                     wp_ref, bp_ref, o_ref):
    """One grid step = (batch b, head h). All tensors here are dense 2-D tiles."""
    h = pl.program_id(1)

    x = x_ref[...]                                                     # (N, E) bf16

    # Per-head Q/K/V projections (weights pre-sliced per head by BlockSpec).
    q = jnp.dot(x, wq_ref[...], preferred_element_type=jnp.float32) + bq_ref[...]  # (N, D) f32
    k = jnp.dot(x, wk_ref[...], preferred_element_type=jnp.float32) + bk_ref[...]
    v = jnp.dot(x, wv_ref[...], preferred_element_type=jnp.float32) + bv_ref[...]

    # energy = q @ k^T (contract last dims; no pre-softmax scaling, per the module).
    energy = jax.lax.dot_general(
        q.astype(jnp.bfloat16), k.astype(jnp.bfloat16),
        dimension_numbers=(((1,), (1,)), ((), ())),
        preferred_element_type=jnp.float32)                            # (N, N) f32
    # TODO(synk): mask path (masked_fill with -inf) not implemented; module default mask=None.

    # Softmax over the last axis in f32; the divide goes to the EUP (approx reciprocal).
    m = jnp.max(energy, axis=-1, keepdims=True)
    e = jnp.exp(energy - m)
    att = e * pl.reciprocal(jnp.sum(e, axis=-1, keepdims=True), approx=True)
    # att_drop has p = 0 -> identity.  Post-softmax 1/sqrt(emb) is folded into wp_ref.

    # (att @ V) @ Wp_head, accumulated across heads into the resident output block.
    ctx = jnp.dot(att.astype(jnp.bfloat16), v.astype(jnp.bfloat16),
                  preferred_element_type=jnp.float32)                  # (N, D)
    contrib = jnp.dot(ctx.astype(jnp.bfloat16), wp_ref[...],
                      preferred_element_type=jnp.float32)              # (N, E)

    @pl.when(h == 0)
    def _init():
        o_ref[...] = jnp.broadcast_to(bp_ref[...], o_ref.shape)        # start from the proj bias

    o_ref[...] = o_ref[...] + contrib


def multi_head_attention(x, w_qkv, b_qkv, w_proj, b_proj, *, emb_size, num_heads):
    """x: (B, N, E); w_qkv: (3E, E), b_qkv: (3E,), w_proj: (E, E), b_proj: (E,)  (PyTorch layouts)."""
    B, N, E = x.shape
    assert E == emb_size and E % num_heads == 0
    H = num_heads
    D = E // H
    scaling = emb_size ** 0.5

    # PyTorch rearrange 'b n (h d qkv) -> (qkv) b h n d' means qkv-Linear output
    # feature j = h*(3D) + 3*d + qkv_idx.  Gather those rows per head so the kernel
    # sees dense per-head (E, D) weight tiles.
    hh = jnp.arange(H)[:, None]
    dd = jnp.arange(D)[None, :]

    def rows(qkv_idx):
        return hh * (3 * D) + 3 * dd + qkv_idx                         # (H, D)

    w_qkv = jnp.asarray(w_qkv)
    b_qkv = jnp.asarray(b_qkv)
    wq = jnp.transpose(w_qkv[rows(0)], (0, 2, 1)).astype(jnp.bfloat16)  # (H, E, D)
    wk = jnp.transpose(w_qkv[rows(1)], (0, 2, 1)).astype(jnp.bfloat16)
    wv = jnp.transpose(w_qkv[rows(2)], (0, 2, 1)).astype(jnp.bfloat16)
    bq = b_qkv[rows(0)][:, None, :].astype(jnp.float32)                 # (H, 1, D)
    bk = b_qkv[rows(1)][:, None, :].astype(jnp.float32)
    bv = b_qkv[rows(2)][:, None, :].astype(jnp.float32)

    # Output projection: ctx columns are ordered (h, d); fold the post-softmax
    # 1/sqrt(emb) scale into the weight (valid since dropout p == 0).
    wp = (jnp.transpose(jnp.asarray(w_proj)) / scaling).reshape(H, D, E).astype(jnp.bfloat16)
    bp = jnp.asarray(b_proj).reshape(1, E).astype(jnp.float32)

    x_bf16 = x.astype(jnp.bfloat16)

    # TODO(synk): for very large N, add a flash-style q-tile grid axis with online
    # softmax (and single-buffer the weight blocks) to bound VMEM on v7x.
    return pl.pallas_call(
        _mha_head_kernel,
        out_shape=jax.ShapeDtypeStruct((B, N, E), jnp.float32),
        grid_spec=pltpu.PrefetchScalarGridSpec(
            num_scalar_prefetch=0,
            grid=(B, H),                       # head axis last: it is the output reduction axis
            in_specs=[
                pl.BlockSpec((None, N, E), lambda b, h: (b, 0, 0)),   # x   (resident across h)
                pl.BlockSpec((None, E, D), lambda b, h: (h, 0, 0)),   # wq  head slice
                pl.BlockSpec((None, E, D), lambda b, h: (h, 0, 0)),   # wk
                pl.BlockSpec((None, E, D), lambda b, h: (h, 0, 0)),   # wv
                pl.BlockSpec((None, 1, D), lambda b, h: (h, 0, 0)),   # bq
                pl.BlockSpec((None, 1, D), lambda b, h: (h, 0, 0)),   # bk
                pl.BlockSpec((None, 1, D), lambda b, h: (h, 0, 0)),   # bv
                pl.BlockSpec((None, D, E), lambda b, h: (h, 0, 0)),   # wp  head slice (pre-scaled)
                pl.BlockSpec((1, E), lambda b, h: (0, 0)),            # bp
            ],
            out_specs=pl.BlockSpec((None, N, E), lambda b, h: (b, 0, 0)),
        ),
        compiler_params=pltpu.CompilerParams(
            dimension_semantics=("parallel", "arbitrary")),
    )(x_bf16, wq, wk, wv, bq, bk, bv, wp, bp)


def _reference(x, w_qkv, b_qkv, w_proj, b_proj, emb_size, num_heads):
    """Pure-JAX f32 mirror of the PyTorch forward for verification."""
    B, N, E = x.shape
    D = E // num_heads
    qkv = x @ w_qkv.T + b_qkv                                 # (B, N, 3E)
    qkv = qkv.reshape(B, N, num_heads, D, 3)                  # 'b n (h d qkv)'
    qkv = jnp.transpose(qkv, (4, 0, 2, 1, 3))                 # '(qkv) b h n d'
    q, k, v = qkv[0], qkv[1], qkv[2]
    energy = jnp.einsum('bhqd,bhkd->bhqk', q, k)
    att = jax.nn.softmax(energy, axis=-1) / (emb_size ** 0.5)
    out = jnp.einsum('bhal,bhlv->bhav', att, v)
    out = jnp.transpose(out, (0, 2, 1, 3)).reshape(B, N, E)
    return out @ w_proj.T + b_proj


if __name__ == "__main__":
    # Small shapes consistent with the module's forward: (batch, seq, emb)
    B, N = 2, 8
    EMB, HEADS = 32, 4

    key = jax.random.PRNGKey(0)
    kx, k1, k2, k3, k4 = jax.random.split(key, 5)
    x = jax.random.normal(kx, (B, N, EMB), dtype=jnp.float32)

    # Deterministic parameter init (PyTorch Linear shapes: (out_features, in_features))
    w_qkv = jax.random.normal(k1, (3 * EMB, EMB), dtype=jnp.float32) * 0.02
    b_qkv = jax.random.normal(k2, (3 * EMB,), dtype=jnp.float32) * 0.02
    w_proj = jax.random.normal(k3, (EMB, EMB), dtype=jnp.float32) * 0.02
    b_proj = jax.random.normal(k4, (EMB,), dtype=jnp.float32) * 0.02

    out = multi_head_attention(x, w_qkv, b_qkv, w_proj, b_proj,
                               emb_size=EMB, num_heads=HEADS)
    out = jax.block_until_ready(out)

    ref = _reference(x, w_qkv, b_qkv, w_proj, b_proj, EMB, HEADS)
    # Tolerance loosened vs. the pure-f32 version because MXU operands are bf16
    # (f32 accumulation) and the softmax divide uses the approx EUP reciprocal.
    np.testing.assert_allclose(np.asarray(out), np.asarray(ref), rtol=2e-2, atol=2e-3)

    print("KERNEL_OK")
</pallas_src>

<mosaic_0001>
module attributes {stable_mosaic.version = 11 : i64} {
  func.func @_mha_head_kernel(%arg0: i32, %arg1: i32, %arg2: memref<1x8x32xbf16, #tpu.memory_space<vmem>>, %arg3: memref<1x32x8xbf16, #tpu.memory_space<vmem>>, %arg4: memref<1x32x8xbf16, #tpu.memory_space<vmem>>, %arg5: memref<1x32x8xbf16, #tpu.memory_space<vmem>>, %arg6: memref<1x1x8xf32, #tpu.memory_space<vmem>>, %arg7: memref<1x1x8xf32, #tpu.memory_space<vmem>>, %arg8: memref<1x1x8xf32, #tpu.memory_space<vmem>>, %arg9: memref<1x8x32xbf16, #tpu.memory_space<vmem>>, %arg10: memref<1x32xf32, #tpu.memory_space<vmem>>, %arg11: memref<1x8x32xf32, #tpu.memory_space<vmem>>) attributes {dimension_semantics = [#tpu.dimension_semantics<parallel>, #tpu.dimension_semantics<arbitrary>], iteration_bounds = array<i64: 2, 4>, scalar_prefetch = 0 : i64, scratch_operands = 0 : i64, tpu.core_type = #tpu.core_type<tc>, window_params = [{transform_indices = @transform_0, window_bounds = array<i64: 1, 8, 32>}, {transform_indices = @transform_1, window_bounds = array<i64: 1, 32, 8>}, {transform_indices = @transform_2, window_bounds = array<i64: 1, 32, 8>}, {transform_indices = @transform_3, window_bounds = array<i64: 1, 32, 8>}, {transform_indices = @transform_4, window_bounds = array<i64: 1, 1, 8>}, {transform_indices = @transform_5, window_bounds = array<i64: 1, 1, 8>}, {transform_indices = @transform_6, window_bounds = array<i64: 1, 1, 8>}, {transform_indices = @transform_7, window_bounds = array<i64: 1, 8, 32>}, {pipeline_mode = #tpu.pipeline_mode<synchronous>, transform_indices = @transform_8, window_bounds = array<i64: 1, 32>}, {transform_indices = @transform_9, window_bounds = array<i64: 1, 8, 32>}]} {
    %c0 = arith.constant 0 : index
    %c0_0 = arith.constant 0 : index
    %c0_1 = arith.constant 0 : index
    %0 = vector.load %arg2[%c0, %c0_0, %c0_1] : memref<1x8x32xbf16, #tpu.memory_space<vmem>>, vector<1x8x32xbf16>
    %1 = vector.shape_cast %0 : vector<1x8x32xbf16> to vector<8x32xbf16>
    %c0_2 = arith.constant 0 : index
    %c0_3 = arith.constant 0 : index
    %c0_4 = arith.constant 0 : index
    %2 = vector.load %arg3[%c0_2, %c0_3, %c0_4] : memref<1x32x8xbf16, #tpu.memory_space<vmem>>, vector<1x32x8xbf16>
    %3 = vector.shape_cast %2 : vector<1x32x8xbf16> to vector<32x8xbf16>
    %cst = arith.constant dense<0.000000e+00> : vector<8x8xf32>
    %4 = tpu.matmul %1, %3, %cst {dimension_numbers = #tpu.dot_dimension_numbers<[1], [0], [0], [1], [0, 0, 1, 1], [], []>} : vector<8x32xbf16>, vector<32x8xbf16>, vector<8x8xf32> -> vector<8x8xf32>
    %c0_5 = arith.constant 0 : index
    %c0_6 = arith.constant 0 : index
    %c0_7 = arith.constant 0 : index
    %5 = vector.load %arg6[%c0_5, %c0_6, %c0_7] : memref<1x1x8xf32, #tpu.memory_space<vmem>>, vector<1x1x8xf32>
    %6 = vector.shape_cast %5 : vector<1x1x8xf32> to vector<1x8xf32>
    %7 = vector.broadcast %6 : vector<1x8xf32> to vector<8x8xf32>
    %8 = arith.addf %4, %7 : vector<8x8xf32>
    %c0_8 = arith.constant 0 : index
    %c0_9 = arith.constant 0 : index
    %c0_10 = arith.constant 0 : index
    %9 = vector.load %arg4[%c0_8, %c0_9, %c0_10] : memref<1x32x8xbf16, #tpu.memory_space<vmem>>, vector<1x32x8xbf16>
    %10 = vector.shape_cast %9 : vector<1x32x8xbf16> to vector<32x8xbf16>
    %cst_11 = arith.constant dense<0.000000e+00> : vector<8x8xf32>
    %11 = tpu.matmul %1, %10, %cst_11 {dimension_numbers = #tpu.dot_dimension_numbers<[1], [0], [0], [1], [0, 0, 1, 1], [], []>} : vector<8x32xbf16>, vector<32x8xbf16>, vector<8x8xf32> -> vector<8x8xf32>
    %c0_12 = arith.constant 0 : index
    %c0_13 = arith.constant 0 : index
    %c0_14 = arith.constant 0 : index
    %12 = vector.load %arg7[%c0_12, %c0_13, %c0_14] : memref<1x1x8xf32, #tpu.memory_space<vmem>>, vector<1x1x8xf32>
    %13 = vector.shape_cast %12 : vector<1x1x8xf32> to vector<1x8xf32>
    %14 = vector.broadcast %13 : vector<1x8xf32> to vector<8x8xf32>
    %15 = arith.addf %11, %14 : vector<8x8xf32>
    %c0_15 = arith.constant 0 : index
    %c0_16 = arith.constant 0 : index
    %c0_17 = arith.constant 0 : index
    %16 = vector.load %arg5[%c0_15, %c0_16, %c0_17] : memref<1x32x8xbf16, #tpu.memory_space<vmem>>, vector<1x32x8xbf16>
    %17 = vector.shape_cast %16 : vector<1x32x8xbf16> to vector<32x8xbf16>
    %cst_18 = arith.constant dense<0.000000e+00> : vector<8x8xf32>
    %18 = tpu.matmul %1, %17, %cst_18 {dimension_numbers = #tpu.dot_dimension_numbers<[1], [0], [0], [1], [0, 0, 1, 1], [], []>} : vector<8x32xbf16>, vector<32x8xbf16>, vector<8x8xf32> -> vector<8x8xf32>
    %c0_19 = arith.constant 0 : index
    %c0_20 = arith.constant 0 : index
    %c0_21 = arith.constant 0 : index
    %19 = vector.load %arg8[%c0_19, %c0_20, %c0_21] : memref<1x1x8xf32, #tpu.memory_space<vmem>>, vector<1x1x8xf32>
    %20 = vector.shape_cast %19 : vector<1x1x8xf32> to vector<1x8xf32>
    %21 = vector.broadcast %20 : vector<1x8xf32> to vector<8x8xf32>
    %22 = arith.addf %18, %21 : vector<8x8xf32>
    %23 = arith.truncf %8 : vector<8x8xf32> to vector<8x8xbf16>
    %24 = arith.truncf %15 : vector<8x8xf32> to vector<8x8xbf16>
    %cst_22 = arith.constant dense<0.000000e+00> : vector<8x8xf32>
    %25 = tpu.matmul %23, %24, %cst_22 {dimension_numbers = #tpu.dot_dimension_numbers<[1], [1], [0], [0], [0, 0, 1, 0], [], []>} : vector<8x8xbf16>, vector<8x8xbf16>, vector<8x8xf32> -> vector<8x8xf32>
    %cst_23 = arith.constant dense<0xFF800000> : vector<8xf32>
    %26 = vector.multi_reduction <maximumf>, %25, %cst_23 [1] : vector<8x8xf32> to vector<8xf32>
    %27 = vector.shape_cast %26 : vector<8xf32> to vector<8x1xf32>
    %28 = vector.broadcast %27 : vector<8x1xf32> to vector<8x8xf32>
    %29 = arith.subf %25, %28 : vector<8x8xf32>
    %30 = math.exp %29 : vector<8x8xf32>
    %cst_24 = arith.constant dense<0.000000e+00> : vector<8xf32>
    %31 = vector.multi_reduction <add>, %30, %cst_24 [1] : vector<8x8xf32> to vector<8xf32>
    %32 = vector.shape_cast %31 : vector<8xf32> to vector<8x1xf32>
    %33 = tpu.reciprocal %32 {approx = true} : vector<8x1xf32> -> vector<8x1xf32>
    %34 = vector.broadcast %33 : vector<8x1xf32> to vector<8x8xf32>
    %35 = arith.mulf %30, %34 : vector<8x8xf32>
    %36 = arith.truncf %35 : vector<8x8xf32> to vector<8x8xbf16>
    %37 = arith.truncf %22 : vector<8x8xf32> to vector<8x8xbf16>
    %cst_25 = arith.constant dense<0.000000e+00> : vector<8x8xf32>
    %38 = tpu.matmul %36, %37, %cst_25 {dimension_numbers = #tpu.dot_dimension_numbers<[1], [0], [0], [1], [0, 0, 1, 1], [], []>} : vector<8x8xbf16>, vector<8x8xbf16>, vector<8x8xf32> -> vector<8x8xf32>
    %39 = arith.truncf %38 : vector<8x8xf32> to vector<8x8xbf16>
    %c0_26 = arith.constant 0 : index
    %c0_27 = arith.constant 0 : index
    %c0_28 = arith.constant 0 : index
    %40 = vector.load %arg9[%c0_26, %c0_27, %c0_28] : memref<1x8x32xbf16, #tpu.memory_space<vmem>>, vector<1x8x32xbf16>
    %41 = vector.shape_cast %40 : vector<1x8x32xbf16> to vector<8x32xbf16>
    %cst_29 = arith.constant dense<0.000000e+00> : vector<8x32xf32>
    %42 = tpu.matmul %39, %41, %cst_29 {dimension_numbers = #tpu.dot_dimension_numbers<[1], [0], [0], [1], [0, 0, 1, 1], [], []>} : vector<8x8xbf16>, vector<8x32xbf16>, vector<8x32xf32> -> vector<8x32xf32>
    %c0_i32 = arith.constant 0 : i32
    %43 = arith.cmpi eq, %arg1, %c0_i32 : i32
    %44 = arith.extui %43 : i1 to i32
    %c0_i32_30 = arith.constant 0 : i32
    %45 = arith.cmpi ne, %44, %c0_i32_30 : i32
    scf.if %45 {
      %c0_37 = arith.constant 0 : index
      %c0_38 = arith.constant 0 : index
      %52 = vector.load %arg10[%c0_37, %c0_38] : memref<1x32xf32, #tpu.memory_space<vmem>>, vector<1x32xf32>
      %53 = vector.shape_cast %52 : vector<1x32xf32> to vector<1x32xf32>
      %54 = vector.broadcast %53 : vector<1x32xf32> to vector<8x32xf32>
      %c0_39 = arith.constant 0 : index
      %c0_40 = arith.constant 0 : index
      %c0_41 = arith.constant 0 : index
      %55 = vector.load %arg11[%c0_39, %c0_40, %c0_41] : memref<1x8x32xf32, #tpu.memory_space<vmem>>, vector<1x8x32xf32>
      %56 = vector.shape_cast %55 : vector<1x8x32xf32> to vector<8x32xf32>
      %57 = vector.shape_cast %54 : vector<8x32xf32> to vector<1x8x32xf32>
      tpu.vector_store %arg11[%c0_39, %c0_40, %c0_41], %57 {strides = array<i32>} : memref<1x8x32xf32, #tpu.memory_space<vmem>>, vector<1x8x32xf32>,
    } else {
    }
    %c0_31 = arith.constant 0 : index
    %c0_32 = arith.constant 0 : index
    %c0_33 = arith.constant 0 : index
    %46 = vector.load %arg11[%c0_31, %c0_32, %c0_33] : memref<1x8x32xf32, #tpu.memory_space<vmem>>, vector<1x8x32xf32>
    %47 = vector.shape_cast %46 : vector<1x8x32xf32> to vector<8x32xf32>
    %48 = arith.addf %47, %42 : vector<8x32xf32>
    %c0_34 = arith.constant 0 : index
    %c0_35 = arith.constant 0 : index
    %c0_36 = arith.constant 0 : index
    %49 = vector.load %arg11[%c0_34, %c0_35, %c0_36] : memref<1x8x32xf32, #tpu.memory_space<vmem>>, vector<1x8x32xf32>
    %50 = vector.shape_cast %49 : vector<1x8x32xf32> to vector<8x32xf32>
    %51 = vector.shape_cast %48 : vector<8x32xf32> to vector<1x8x32xf32>
    tpu.vector_store %arg11[%c0_34, %c0_35, %c0_36], %51 {strides = array<i32>} : memref<1x8x32xf32, #tpu.memory_space<vmem>>, vector<1x8x32xf32>,
    return
  }
  func.func @transform_0(%arg0: i32, %arg1: i32) -> (i32, i32, i32) {
    %c0_i32 = arith.constant 0 : i32
    %c0_i32_0 = arith.constant 0 : i32
    %c0_i32_1 = arith.constant 0 : i32
    return %arg0, %c0_i32, %c0_i32_0 : i32, i32, i32
  }
  func.func @transform_1(%arg0: i32, %arg1: i32) -> (i32, i32, i32) {
    %c0_i32 = arith.constant 0 : i32
    %c0_i32_0 = arith.constant 0 : i32
    %c0_i32_1 = arith.constant 0 : i32
    return %arg1, %c0_i32, %c0_i32_0 : i32, i32, i32
  }
  func.func @transform_2(%arg0: i32, %arg1: i32) -> (i32, i32, i32) {
    %c0_i32 = arith.constant 0 : i32
    %c0_i32_0 = arith.constant 0 : i32
    %c0_i32_1 = arith.constant 0 : i32
    return %arg1, %c0_i32, %c0_i32_0 : i32, i32, i32
  }
  func.func @transform_3(%arg0: i32, %arg1: i32) -> (i32, i32, i32) {
    %c0_i32 = arith.constant 0 : i32
    %c0_i32_0 = arith.constant 0 : i32
    %c0_i32_1 = arith.constant 0 : i32
    return %arg1, %c0_i32, %c0_i32_0 : i32, i32, i32
  }
  func.func @transform_4(%arg0: i32, %arg1: i32) -> (i32, i32, i32) {
    %c0_i32 = arith.constant 0 : i32
    %c0_i32_0 = arith.constant 0 : i32
    %c0_i32_1 = arith.constant 0 : i32
    return %arg1, %c0_i32, %c0_i32_0 : i32, i32, i32
  }
  func.func @transform_5(%arg0: i32, %arg1: i32) -> (i32, i32, i32) {
    %c0_i32 = arith.constant 0 : i32
    %c0_i32_0 = arith.constant 0 : i32
    %c0_i32_1 = arith.constant 0 : i32
    return %arg1, %c0_i32, %c0_i32_0 : i32, i32, i32
  }
  func.func @transform_6(%arg0: i32, %arg1: i32) -> (i32, i32, i32) {
    %c0_i32 = arith.constant 0 : i32
    %c0_i32_0 = arith.constant 0 : i32
    %c0_i32_1 = arith.constant 0 : i32
    return %arg1, %c0_i32, %c0_i32_0 : i32, i32, i32
  }
  func.func @transform_7(%arg0: i32, %arg1: i32) -> (i32, i32, i32) {
    %c0_i32 = arith.constant 0 : i32
    %c0_i32_0 = arith.constant 0 : i32
    %c0_i32_1 = arith.constant 0 : i32
    return %arg1, %c0_i32, %c0_i32_0 : i32, i32, i32
  }
  func.func @transform_8(%arg0: i32, %arg1: i32) -> (i32, i32) {
    %c0_i32 = arith.constant 0 : i32
    %c0_i32_0 = arith.constant 0 : i32
    %c0_i32_1 = arith.constant 0 : i32
    return %c0_i32, %c0_i32_0 : i32, i32
  }
  func.func @transform_9(%arg0: i32, %arg1: i32) -> (i32, i32, i32) {
    %c0_i32 = arith.constant 0 : i32
    %c0_i32_0 = arith.constant 0 : i32
    %c0_i32_1 = arith.constant 0 : i32
    return %arg0, %c0_i32, %c0_i32_0 : i32, i32, i32
  }
}

</mosaic_0001>

<llo_original>
// kernel: tpu_custom_call.1
$region0: #{tpu_custom_call.1}
  #allocation0 [shape = 'u32[]', space=smem, size = 0x4, offset = 0x4, fixed_abs, tag = 'smem constant byte address 0x4 - core index']
  #allocation1 [shape = 'u32[144,128]{1,0:T(1,128)}', space=vmem, size = 0x12000, scoped, tag = 'internal scratch']
  %s0 = inlined_call_operand.vmem [shape: bf16[2,8,32], index: 0, kind: input, shape index: {}]
  %s1 = inlined_call_operand.vmem [shape: bf16[4,32,8], index: 1, kind: input, shape index: {}]
  %s2 = inlined_call_operand.vmem [shape: bf16[4,32,8], index: 2, kind: input, shape index: {}]
  %s3 = inlined_call_operand.vmem [shape: bf16[4,32,8], index: 3, kind: input, shape index: {}]
  %s4 = inlined_call_operand.vmem [shape: f32[4,1,8], index: 4, kind: input, shape index: {}]
  %s5 = inlined_call_operand.vmem [shape: f32[4,1,8], index: 5, kind: input, shape index: {}]
  %s6 = inlined_call_operand.vmem [shape: f32[4,1,8], index: 6, kind: input, shape index: {}]
  %s7 = inlined_call_operand.vmem [shape: bf16[4,8,32], index: 7, kind: input, shape index: {}]
  %s8 = inlined_call_operand.vmem [shape: f32[1,32], index: 8, kind: input, shape index: {}]
  %s9 = inlined_call_operand.hbm [shape: f32[2,8,32], index: 9, kind: output, shape index: {}]
  %s10 = sld [smem:[#allocation0]]
  $region73: #{tpu_custom_call.1} parent=0
    _
  %s12 = ssub.s32 1, %s10
  %s13 = scalar_select 0, %s12, %s10
  $region1: #{tpu_custom_call.1} parent=0
    #allocation2 [shape = 'u8[8192]{0}', space=vmem, size = 0x2000, scoped, tag = 'output window, operand 0']
    #allocation3 [shape = 's32[2]{0}', space=sflag, size = 0x8, scoped, tag = 'scoped memory for tpu_custom_call.1']
    %14 = vsyncpa [#allocation3], 0
    %s15 = scalar_lea.sflag [#allocation3], 1
    %16 = vsyncpa %s15, 0
    loop: start=0, step=1, limit=10
    $region2: #{tpu_custom_call.1} parent=1 // loop_pre_header
      _
    $region3: #{tpu_custom_call.1} parent=1 // loop_header
      %s18 = sphi 0, %s22
      %p19 = scmp.ge.s32.totalorder %s18, 10
      %s25 = sphi 0, %s37
      %s26 = sphi 0, %s33
      %s27 = sphi 0, %s25
      %s28 = sphi 0, %s26
      %s29 = sphi 0, %s27
      %s30 = sphi 0, %s28
      %s40 = sphi 0, %s42
      %s43 = sphi 0, %s40
      %s44 = sphi 0, %s43
      %s60 = sphi 0, %s44
      %s66 = sphi 0, %s68
      %s69 = sphi 0, %s66
      %s70 = sphi 0, %s69
      %s86 = sphi 0, %s70
      %s92 = sphi 0, %s94
      %s95 = sphi 0, %s92
      %s96 = sphi 0, %s95
      %s112 = sphi 0, %s96
      %s118 = sphi 0, %s120
      %s121 = sphi 0, %s118
      %s122 = sphi 0, %s121
      %s138 = sphi 0, %s122
      %s144 = sphi 0, %s146
      %s147 = sphi 0, %s144
      %s148 = sphi 0, %s147
      %s164 = sphi 0, %s148
      %s170 = sphi 0, %s172
      %s173 = sphi 0, %s170
      %s174 = sphi 0, %s173
      %s190 = sphi 0, %s174
      %s196 = sphi 0, %s198
      %s199 = sphi 0, %s196
      %s200 = sphi 0, %s199
      %s216 = sphi 0, %s200
      %s222 = sphi 0, %s224
      %s225 = sphi 0, %s222
      %s226 = sphi 0, %s225
      %s242 = sphi 0, %s226
      %s246 = sphi 0, %s246
      %s248 = sphi 0, %s246
      %s249 = sphi 0, %s248
      %s263 = sphi 0, %s249
      %s269 = sphi 0, %s271
      %s272 = sphi 0, %s269
      %s273 = sphi 0, %s272
      %s289 = sphi 0, %s273
    $region4: #{tpu_custom_call.1} parent=1 // loop_header_branch
      %21 = sbr.rel (%p19) target = $region8
    $region5: #{tpu_custom_call.1} parent=1 // loop_body
      %s23 = ssub.s32 %s18, 1
      %s24 = ssub.s32 %s18, 2
      %s31 = sadd.s32 1, %s26
      %p32 = scmp.ge.s32.totalorder %s31, 4
      %s33 = scalar_select %p32, 0, %s31
      %s34 = sadd.s32 1, %s25
      %s35 = scalar_select %p32, %s34, %s25
      %p36 = scmp.ge.s32.totalorder %s35, 2
      %s37 = scalar_select %p36, 0, %s35
      %s38 = ssub.s32 %s25, %s37
      %p39 = scmp.eq.s32.totalorder %s38, 0
      %s41 = sadd.s32 %s40, 1
      %s42 = scalar_select %p39, %s40, %s41
      %p45 = pneg %p39
      %p46 = scmp.eq.s32.totalorder %s18, 7
      %p47 = por %p45, %p46
      %p48 = scmp.ne.s32.totalorder %s40, %s43
      %p49 = scmp.eq.s32.totalorder %s18, 0
      %p50 = por %p48, %p49
      %p51 = scmp.ne.s32.totalorder %s40, %s43
      %p52 = scmp.eq.s32.totalorder %s23, 7
      %p53 = por %p51, %p52
      %p54 = scmp.ne.s32.totalorder %s43, %s44
      %p55 = scmp.eq.s32.totalorder %s23, 0
      %p56 = por %p54, %p55
      %p57 = scmp.ne.s32.totalorder %s43, %s44
      %p58 = scmp.eq.s32.totalorder %s24, 7
      %p59 = por %p57, %p58
      %p61 = scmp.ne.s32.totalorder %s44, %s60
      %p62 = scmp.eq.s32.totalorder %s24, 0
      %p63 = por %p61, %p62
      %s64 = ssub.s32 %s26, %s33
      %p65 = scmp.eq.s32.totalorder %s64, 0
      %s67 = sadd.s32 %s66, 1
      %s68 = scalar_select %p65, %s66, %s67
      %p71 = pneg %p65
      %p72 = scmp.eq.s32.totalorder %s18, 7
      %p73 = por %p71, %p72
      %p74 = scmp.ne.s32.totalorder %s66, %s69
      %p75 = scmp.eq.s32.totalorder %s18, 0
      %p76 = por %p74, %p75
      %p77 = scmp.ne.s32.totalorder %s66, %s69
      %p78 = scmp.eq.s32.totalorder %s23, 7
      %p79 = por %p77, %p78
      %p80 = scmp.ne.s32.totalorder %s69, %s70
      %p81 = scmp.eq.s32.totalorder %s23, 0
      %p82 = por %p80, %p81
      %p83 = scmp.ne.s32.totalorder %s69, %s70
      %p84 = scmp.eq.s32.totalorder %s24, 7
      %p85 = por %p83, %p84
      %p87 = scmp.ne.s32.totalorder %s70, %s86
      %p88 = scmp.eq.s32.totalorder %s24, 0
      %p89 = por %p87, %p88
      %s90 = ssub.s32 %s26, %s33
      %p91 = scmp.eq.s32.totalorder %s90, 0
      %s93 = sadd.s32 %s92, 1
      %s94 = scalar_select %p91, %s92, %s93
      %p97 = pneg %p91
      %p98 = scmp.eq.s32.totalorder %s18, 7
      %p99 = por %p97, %p98
      %p100 = scmp.ne.s32.totalorder %s92, %s95
      %p101 = scmp.eq.s32.totalorder %s18, 0
      %p102 = por %p100, %p101
      %p103 = scmp.ne.s32.totalorder %s92, %s95
      %p104 = scmp.eq.s32.totalorder %s23, 7
      %p105 = por %p103, %p104
      %p106 = scmp.ne.s32.totalorder %s95, %s96
      %p107 = scmp.eq.s32.totalorder %s23, 0
      %p108 = por %p106, %p107
      %p109 = scmp.ne.s32.totalorder %s95, %s96
      %p110 = scmp.eq.s32.totalorder %s24, 7
      %p111 = por %p109, %p110
      %p113 = scmp.ne.s32.totalorder %s96, %s112
      %p114 = scmp.eq.s32.totalorder %s24, 0
      %p115 = por %p113, %p114
      %s116 = ssub.s32 %s26, %s33
      %p117 = scmp.eq.s32.totalorder %s116, 0
      %s119 = sadd.s32 %s118, 1
      %s120 = scalar_select %p117, %s118, %s119
      %p123 = pneg %p117
      %p124 = scmp.eq.s32.totalorder %s18, 7
      %p125 = por %p123, %p124
      %p126 = scmp.ne.s32.totalorder %s118, %s121
      %p127 = scmp.eq.s32.totalorder %s18, 0
      %p128 = por %p126, %p127
      %p129 = scmp.ne.s32.totalorder %s118, %s121
      %p130 = scmp.eq.s32.totalorder %s23, 7
      %p131 = por %p129, %p130
      %p132 = scmp.ne.s32.totalorder %s121, %s122
      %p133 = scmp.eq.s32.totalorder %s23, 0
      %p134 = por %p132, %p133
      %p135 = scmp.ne.s32.totalorder %s121, %s122
      %p136 = scmp.eq.s32.totalorder %s24, 7
      %p137 = por %p135, %p136
      %p139 = scmp.ne.s32.totalorder %s122, %s138
      %p140 = scmp.eq.s32.totalorder %s24, 0
      %p141 = por %p139, %p140
      %s142 = ssub.s32 %s26, %s33
      %p143 = scmp.eq.s32.totalorder %s142, 0
      %s145 = sadd.s32 %s144, 1
      %s146 = scalar_select %p143, %s144, %s145
      %p149 = pneg %p143
      %p150 = scmp.eq.s32.totalorder %s18, 7
      %p151 = por %p149, %p150
      %p152 = scmp.ne.s32.totalorder %s144, %s147
      %p153 = scmp.eq.s32.totalorder %s18, 0
      %p154 = por %p152, %p153
      %p155 = scmp.ne.s32.totalorder %s144, %s147
      %p156 = scmp.eq.s32.totalorder %s23, 7
      %p157 = por %p155, %p156
      %p158 = scmp.ne.s32.totalorder %s147, %s148
      %p159 = scmp.eq.s32.totalorder %s23, 0
      %p160 = por %p158, %p159
      %p161 = scmp.ne.s32.totalorder %s147, %s148
      %p162 = scmp.eq.s32.totalorder %s24, 7
      %p163 = por %p161, %p162
      %p165 = scmp.ne.s32.totalorder %s148, %s164
      %p166 = scmp.eq.s32.totalorder %s24, 0
      %p167 = por %p165, %p166
      %s168 = ssub.s32 %s26, %s33
      %p169 = scmp.eq.s32.totalorder %s168, 0
      %s171 = sadd.s32 %s170, 1
      %s172 = scalar_select %p169, %s170, %s171
      %p175 = pneg %p169
      %p176 = scmp.eq.s32.totalorder %s18, 7
      %p177 = por %p175, %p176
      %p178 = scmp.ne.s32.totalorder %s170, %s173
      %p179 = scmp.eq.s32.totalorder %s18, 0
      %p180 = por %p178, %p179
      %p181 = scmp.ne.s32.totalorder %s170, %s173
      %p182 = scmp.eq.s32.totalorder %s23, 7
      %p183 = por %p181, %p182
      %p184 = scmp.ne.s32.totalorder %s173, %s174
      %p185 = scmp.eq.s32.totalorder %s23, 0
      %p186 = por %p184, %p185
      %p187 = scmp.ne.s32.totalorder %s173, %s174
      %p188 = scmp.eq.s32.totalorder %s24, 7
      %p189 = por %p187, %p188
      %p191 = scmp.ne.s32.totalorder %s174, %s190
      %p192 = scmp.eq.s32.totalorder %s24, 0
      %p193 = por %p191, %p192
      %s194 = ssub.s32 %s26, %s33
      %p195 = scmp.eq.s32.totalorder %s194, 0
      %s197 = sadd.s32 %s196, 1
      %s198 = scalar_select %p195, %s196, %s197
      %p201 = pneg %p195
      %p202 = scmp.eq.s32.totalorder %s18, 7
      %p203 = por %p201, %p202
      %p204 = scmp.ne.s32.totalorder %s196, %s199
      %p205 = scmp.eq.s32.totalorder %s18, 0
      %p206 = por %p204, %p205
      %p207 = scmp.ne.s32.totalorder %s196, %s199
      %p208 = scmp.eq.s32.totalorder %s23, 7
      %p209 = por %p207, %p208
      %p210 = scmp.ne.s32.totalorder %s199, %s200
      %p211 = scmp.eq.s32.totalorder %s23, 0
      %p212 = por %p210, %p211
      %p213 = scmp.ne.s32.totalorder %s199, %s200
      %p214 = scmp.eq.s32.totalorder %s24, 7
      %p215 = por %p213, %p214
      %p217 = scmp.ne.s32.totalorder %s200, %s216
      %p218 = scmp.eq.s32.totalorder %s24, 0
      %p219 = por %p217, %p218
      %s220 = ssub.s32 %s26, %s33
      %p221 = scmp.eq.s32.totalorder %s220, 0
      %s223 = sadd.s32 %s222, 1
      %s224 = scalar_select %p221, %s222, %s223
      %p227 = pneg %p221
      %p228 = scmp.eq.s32.totalorder %s18, 7
      %p229 = por %p227, %p228
      %p230 = scmp.ne.s32.totalorder %s222, %s225
      %p231 = scmp.eq.s32.totalorder %s18, 0
      %p232 = por %p230, %p231
      %p233 = scmp.ne.s32.totalorder %s222, %s225
      %p234 = scmp.eq.s32.totalorder %s23, 7
      %p235 = por %p233, %p234
      %p236 = scmp.ne.s32.totalorder %s225, %s226
      %p237 = scmp.eq.s32.totalorder %s23, 0
      %p238 = por %p236, %p237
      %p239 = scmp.ne.s32.totalorder %s225, %s226
      %p240 = scmp.eq.s32.totalorder %s24, 7
      %p241 = por %p239, %p240
      %p243 = scmp.ne.s32.totalorder %s226, %s242
      %p244 = scmp.eq.s32.totalorder %s24, 0
      %p245 = por %p243, %p244
      %s247 = sadd.s32 %s246, 1
      %p250 = scmp.eq.s32.totalorder %s18, 7
      %p251 = scmp.ne.s32.totalorder %s246, %s248
      %p252 = scmp.eq.s32.totalorder %s18, 0
      %p253 = por %p251, %p252
      %p254 = scmp.ne.s32.totalorder %s246, %s248
      %p255 = scmp.eq.s32.totalorder %s23, 7
      %p256 = por %p254, %p255
      %p257 = scmp.ne.s32.totalorder %s248, %s249
      %p258 = scmp.eq.s32.totalorder %s23, 0
      %p259 = por %p257, %p258
      %p260 = scmp.ne.s32.totalorder %s248, %s249
      %p261 = scmp.eq.s32.totalorder %s24, 7
      %p262 = por %p260, %p261
      %p264 = scmp.ne.s32.totalorder %s249, %s263
      %p265 = scmp.eq.s32.totalorder %s24, 0
      %p266 = por %p264, %p265
      %s267 = ssub.s32 %s25, %s37
      %p268 = scmp.eq.s32.totalorder %s267, 0
      %s270 = sadd.s32 %s269, 1
      %s271 = scalar_select %p268, %s269, %s270
      %p274 = pneg %p268
      %p275 = scmp.eq.s32.totalorder %s18, 7
      %p276 = por %p274, %p275
      %p277 = scmp.ne.s32.totalorder %s269, %s272
      %p278 = scmp.eq.s32.totalorder %s18, 0
      %p279 = por %p277, %p278
      %p280 = scmp.ne.s32.totalorder %s269, %s272
      %p281 = scmp.eq.s32.totalorder %s23, 7
      %p282 = por %p280, %p281
      %p283 = scmp.ne.s32.totalorder %s272, %s273
      %p284 = scmp.eq.s32.totalorder %s23, 0
      %p285 = por %p283, %p284
      %p286 = scmp.ne.s32.totalorder %s272, %s273
      %p287 = scmp.eq.s32.totalorder %s24, 7
      %p288 = por %p286, %p287
      %p290 = scmp.ne.s32.totalorder %s273, %s289
      %p291 = scmp.eq.s32.totalorder %s24, 0
      %p292 = por %p290, %p291
      %p293 = scmp.le.s32.totalorder 1, %s18
      %p294 = scmp.lt.s32.totalorder %s18, 9
      %p295 = pnand %p293, %p294
      %p296 = pneg %p295
      // Predicated region
      $region9: #{tpu_custom_call.1} parent=5 // pred_check
        _
      $region10: #{tpu_custom_call.1} parent=5 // pred_check_branch
        %298 = sbr.rel (%p295) target = $region12
      $region11: #{tpu_custom_call.1} parent=5 // pred_region
        %s299 = ssub.s32 %s18, 1
        // Predicated region
        $region13: #{tpu_custom_call.1} parent=11 // pred_check
          %p300 = pneg %p259
        $region14: #{tpu_custom_call.1} parent=11 // pred_check_branch
          %302 = sbr.rel (%p300) target = $region16
        $region15: #{tpu_custom_call.1} parent=11 // pred_region
          _
        $region16: #{tpu_custom_call.1} parent=11 // pred_fallthru
          _
      $region12: #{tpu_custom_call.1} parent=5 // pred_fallthru
        _
      %p303 = scmp.lt.s32.totalorder %s18, 8
      // Predicated region
      $region17: #{tpu_custom_call.1} parent=5 // pred_check
        %p304 = pneg %p303
      $region18: #{tpu_custom_call.1} parent=5 // pred_check_branch
        %306 = sbr.rel (%p304) target = $region20
      $region19: #{tpu_custom_call.1} parent=5 // pred_region
        // Predicated region
        $region21: #{tpu_custom_call.1} parent=19 // pred_check
          %p307 = pneg %p50
        $region22: #{tpu_custom_call.1} parent=19 // pred_check_branch
          %309 = sbr.rel (%p307) target = $region24
        $region23: #{tpu_custom_call.1} parent=19 // pred_region
          %p310 = scmp.lt.s32.totalorder %s25, 1
          %s311 = scalar_select %p310, %s25, 1
          %s312 = smul.addr %s311, 4
          %s313 = scalar_lea.vmem %s0, %s312
        $region24: #{tpu_custom_call.1} parent=19 // pred_fallthru
          _
        // Predicated region
        $region25: #{tpu_custom_call.1} parent=19 // pred_check
          %p314 = pneg %p76
        $region26: #{tpu_custom_call.1} parent=19 // pred_check_branch
          %316 = sbr.rel (%p314) target = $region28
        $region27: #{tpu_custom_call.1} parent=19 // pred_region
          %p317 = scmp.lt.s32.totalorder %s26, 3
          %s318 = scalar_select %p317, %s26, 3
          %s319 = smul.addr %s318, 4
          %s320 = smul.addr %s319, 4
          %s321 = scalar_lea.vmem %s1, %s320
        $region28: #{tpu_custom_call.1} parent=19 // pred_fallthru
          _
        // Predicated region
        $region29: #{tpu_custom_call.1} parent=19 // pred_check
          %p322 = pneg %p102
        $region30: #{tpu_custom_call.1} parent=19 // pred_check_branch
          %324 = sbr.rel (%p322) target = $region32
        $region31: #{tpu_custom_call.1} parent=19 // pred_region
          %p325 = scmp.lt.s32.totalorder %s26, 3
          %s326 = scalar_select %p325, %s26, 3
          %s327 = smul.addr %s326, 4
          %s328 = smul.addr %s327, 4
          %s329 = scalar_lea.vmem %s2, %s328
        $region32: #{tpu_custom_call.1} parent=19 // pred_fallthru
          _
        // Predicated region
        $region33: #{tpu_custom_call.1} parent=19 // pred_check
          %p330 = pneg %p128
        $region34: #{tpu_custom_call.1} parent=19 // pred_check_branch
          %332 = sbr.rel (%p330) target = $region36
        $region35: #{tpu_custom_call.1} parent=19 // pred_region
          %p333 = scmp.lt.s32.totalorder %s26, 3
          %s334 = scalar_select %p333, %s26, 3
          %s335 = smul.addr %s334, 4
          %s336 = smul.addr %s335, 4
          %s337 = scalar_lea.vmem %s3, %s336
        $region36: #{tpu_custom_call.1} parent=19 // pred_fallthru
          _
        // Predicated region
        $region37: #{tpu_custom_call.1} parent=19 // pred_check
          %p338 = pneg %p154
        $region38: #{tpu_custom_call.1} parent=19 // pred_check_branch
          %340 = sbr.rel (%p338) target = $region40
        $region39: #{tpu_custom_call.1} parent=19 // pred_region
          %p341 = scmp.lt.s32.totalorder %s26, 3
          %s342 = scalar_select %p341, %s26, 3
          %s343 = scalar_lea.vmem %s4, %s342
        $region40: #{tpu_custom_call.1} parent=19 // pred_fallthru
          _
        // Predicated region
        $region41: #{tpu_custom_call.1} parent=19 // pred_check
          %p344 = pneg %p180
        $region42: #{tpu_custom_call.1} parent=19 // pred_check_branch
          %346 = sbr.rel (%p344) target = $region44
        $region43: #{tpu_custom_call.1} parent=19 // pred_region
          %p347 = scmp.lt.s32.totalorder %s26, 3
          %s348 = scalar_select %p347, %s26, 3
          %s349 = scalar_lea.vmem %s5, %s348
        $region44: #{tpu_custom_call.1} parent=19 // pred_fallthru
          _
        // Predicated region
        $region45: #{tpu_custom_call.1} parent=19 // pred_check
          %p350 = pneg %p206
        $region46: #{tpu_custom_call.1} parent=19 // pred_check_branch
          %352 = sbr.rel (%p350) target = $region48
        $region47: #{tpu_custom_call.1} parent=19 // pred_region
          %p353 = scmp.lt.s32.totalorder %s26, 3
          %s354 = scalar_select %p353, %s26, 3
          %s355 = scalar_lea.vmem %s6, %s354
        $region48: #{tpu_custom_call.1} parent=19 // pred_fallthru
          _
        // Predicated region
        $region49: #{tpu_custom_call.1} parent=19 // pred_check
          %p356 = pneg %p232
        $region50: #{tpu_custom_call.1} parent=19 // pred_check_branch
          %358 = sbr.rel (%p356) target = $region52
        $region51: #{tpu_custom_call.1} parent=19 // pred_region
          %p359 = scmp.lt.s32.totalorder %s26, 3
          %s360 = scalar_select %p359, %s26, 3
          %s361 = smul.addr %s360, 4
          %s362 = scalar_lea.vmem %s7, %s361
        $region52: #{tpu_custom_call.1} parent=19 // pred_fallthru
          _
      $region20: #{tpu_custom_call.1} parent=5 // pred_fallthru
        _
      %p363 = scmp.le.s32.totalorder 1, %s18
      %p364 = scmp.lt.s32.totalorder %s18, 9
      %p365 = pnand %p363, %p364
      %p366 = pneg %p365
      // Predicated region
      $region53: #{tpu_custom_call.1} parent=5 // pred_check
        _
      $region54: #{tpu_custom_call.1} parent=5 // pred_check_branch
        %368 = sbr.rel (%p365) target = $region56
      $region55: #{tpu_custom_call.1} parent=5 // pred_region
        %s369 = ssub.s32 %s18, 1
        %p370 = scmp.lt.s32.totalorder %s27, 1
        %s371 = scalar_select %p370, %s27, 1
        %s372 = smul.addr %s371, 4
        %s373 = scalar_lea.vmem %s0, %s372
        %p374 = pneg %p56
        %p375 = pneg %p53
        %p376 = scmp.lt.s32.totalorder %s28, 3
        %s377 = scalar_select %p376, %s28, 3
        %s378 = smul.addr %s377, 4
        %s379 = smul.addr %s378, 4
        %s380 = scalar_lea.vmem %s1, %s379
        %p381 = pneg %p82
        %p382 = pneg %p79
        %p383 = scmp.lt.s32.totalorder %s28, 3
        %s384 = scalar_select %p383, %s28, 3
        %s385 = smul.addr %s384, 4
        %s386 = smul.addr %s385, 4
        %s387 = scalar_lea.vmem %s2, %s386
        %p388 = pneg %p108
        %p389 = pneg %p105
        %p390 = scmp.lt.s32.totalorder %s28, 3
        %s391 = scalar_select %p390, %s28, 3
        %s392 = smul.addr %s391, 4
        %s393 = smul.addr %s392, 4
        %s394 = scalar_lea.vmem %s3, %s393
        %p395 = pneg %p134
        %p396 = pneg %p131
        %p397 = scmp.lt.s32.totalorder %s28, 3
        %s398 = scalar_select %p397, %s28, 3
        %s399 = scalar_lea.vmem %s4, %s398
        %p400 = pneg %p160
        %p401 = pneg %p157
        %p402 = scmp.lt.s32.totalorder %s28, 3
        %s403 = scalar_select %p402, %s28, 3
        %s404 = scalar_lea.vmem %s5, %s403
        %p405 = pneg %p186
        %p406 = pneg %p183
        %p407 = scmp.lt.s32.totalorder %s28, 3
        %s408 = scalar_select %p407, %s28, 3
        %s409 = scalar_lea.vmem %s6, %s408
        %p410 = pneg %p212
        %p411 = pneg %p209
        %p412 = scmp.lt.s32.totalorder %s28, 3
        %s413 = scalar_select %p412, %s28, 3
        %s414 = smul.addr %s413, 4
        %s415 = scalar_lea.vmem %s7, %s414
        %p416 = pneg %p238
        %p417 = pneg %p235
        %p418 = pneg %p259
        %p419 = pneg %p256
        %p420 = pneg %p285
        %p421 = pneg %p282
        %s422 = sand.u32 %s272, 1
        %s423 = scalar_lea.sflag [#allocation3], %s422
        %s424 = sand.u32 %s272, 1
        %s425 = smul.addr %s424, 8
        %s426 = scalar_lea.vmem [#allocation2], %s425
        %p427 = scmp.lt.s32.totalorder %s27, 1
        %s428 = scalar_select %p427, %s27, 1
        %s429 = smul.addr %s428, 4
        %s430 = scalar_lea.vmem %s0, %s429
        %p431 = scmp.lt.s32.totalorder %s28, 3
        %s432 = scalar_select %p431, %s28, 3
        %s433 = smul.addr %s432, 4
        %s434 = smul.addr %s433, 4
        %s435 = scalar_lea.vmem %s1, %s434
        %p436 = scmp.lt.s32.totalorder %s28, 3
        %s437 = scalar_select %p436, %s28, 3
        %s438 = smul.addr %s437, 4
        %s439 = smul.addr %s438, 4
        %s440 = scalar_lea.vmem %s2, %s439
        %p441 = scmp.lt.s32.totalorder %s28, 3
        %s442 = scalar_select %p441, %s28, 3
        %s443 = smul.addr %s442, 4
        %s444 = smul.addr %s443, 4
        %s445 = scalar_lea.vmem %s3, %s444
        %p446 = scmp.lt.s32.totalorder %s28, 3
        %s447 = scalar_select %p446, %s28, 3
        %s448 = scalar_lea.vmem %s4, %s447
        %p449 = scmp.lt.s32.totalorder %s28, 3
        %s450 = scalar_select %p449, %s28, 3
        %s451 = scalar_lea.vmem %s5, %s450
        %p452 = scmp.lt.s32.totalorder %s28, 3
        %s453 = scalar_select %p452, %s28, 3
        %s454 = scalar_lea.vmem %s6, %s453
        %p455 = scmp.lt.s32.totalorder %s28, 3
        %s456 = scalar_select %p455, %s28, 3
        %s457 = smul.addr %s456, 4
        %s458 = scalar_lea.vmem %s7, %s457
        %v460 = vld [vmem:[%s430] sm:$0xf]
        %v461 = vld [vmem:[%s435] sm:$0xf]
        %v462 = vld [vmem:[%s435 + $0x4] sm:$0xf]
        %v463 = vld [vmem:[%s435 + $0x8] sm:$0xf]
        %v464 = vld [vmem:[%s435 + $0xc] sm:$0xf]
        %v465 = vld [vmem:[%s448] sm:$0x1]
        %v467 = vlaneseq
        %v468 = vshrl.u32 %v467, 7
        %v469 = vsub.s32 0, %v468
        %v470 = vrot.slane %v465, %v469
        %v476 = vunpack.c.l.b16 %v461
        %v477 = vunpack.c.l.b16 %v462
        %v478 = vunpack.c.l.b16 %v463
        %v479 = vunpack.c.l.b16 %v464
        %v480 = vpack.c.b16 %v477, %v476
        %v481 = vpack.c.b16 %v479, %v478
        %vm484 = vcmask 261120
        %v486 = vsel %vm484, %v460, 0
        %488 = vmatprep.subr.bf16.mxu0 0
        %489 = vmatpush1.bf16.msra.mxu0 0
        %490 = vmatprep.subr.bf16.mxu0 0
        %491 = vmatpush1.bf16.msra.mxu0 0
        %492 = vmatprep.subr.bf16.mxu0 0
        %493 = vmatpush1.bf16.msra.mxu0 0
        %494 = vmatprep.subr.bf16.mxu0 0
        %495 = vmatpush1.bf16.msra.mxu0 0
        %496 = vmatprep.subr.bf16.mxu0 0
        %497 = vmatpush1.bf16.msra.mxu0 0
        %498 = vmatprep.subr.bf16.mxu0 0
        %499 = vmatpush1.bf16.msra.mxu0 0
        %500 = vmatprep.subr.bf16.mxu0 0
        %501 = vmatpush1.bf16.msra.mxu0 %v481
        %502 = vmatprep.subr.bf16.mxu0 0
        %503 = vmatpush1.bf16.msra.mxu0 %v480
        %504 = vmatprep.subr.bf16.mxu0 0
        %505 = vmatpush2.bf16.msra.mxu0 0
        %506 = vmatprep.subr.bf16.mxu0 0
        %507 = vmatpush2.bf16.msra.mxu0 0
        %508 = vmatprep.subr.bf16.mxu0 0
        %509 = vmatpush2.bf16.msra.mxu0 0
        %510 = vmatprep.subr.bf16.mxu0 0
        %511 = vmatpush2.bf16.msra.mxu0 0
        %512 = vmatprep.subr.bf16.mxu0 0
        %513 = vmatpush2.bf16.msra.mxu0 0
        %514 = vmatprep.subr.bf16.mxu0 0
        %515 = vmatpush2.bf16.msra.mxu0 0
        %516 = vmatprep.subr.bf16.mxu0 0
        %517 = vmatpush2.bf16.msra.mxu0 0
        %518 = vmatprep.subr.bf16.mxu0 0
        %519 = vmatpush2.bf16.msra.mxu0 0
        %520 = vmatprep.mubr.bf16.mxu0 0
        %521 = vmatmul.mubr.bf16.gmra.mxu0 %v486
        %v522 = vpop.f32.mrf.mxu0
        %v523 = vadd.f32 %v470, %v522
        %v524 = vpop.f32.mrf.mxu0
        %v525 = vpop.f32.mrf.mxu0
        %v526 = vpop.f32.mrf.mxu0
        %527 = vdwg.mxu0
        %v528 = vld [vmem:[%s440] sm:$0xf]
        %v529 = vld [vmem:[%s440 + $0x4] sm:$0xf]
        %v530 = vld [vmem:[%s440 + $0x8] sm:$0xf]
        %v531 = vld [vmem:[%s440 + $0xc] sm:$0xf]
        %v532 = vld [vmem:[%s451] sm:$0x1]
        %v534 = vlaneseq
        %v535 = vshrl.u32 %v534, 7
        %v536 = vsub.s32 0, %v535
        %v537 = vrot.slane %v532, %v536
        %v543 = vunpack.c.l.b16 %v528
        %v544 = vunpack.c.l.b16 %v529
        %v545 = vunpack.c.l.b16 %v530
        %v546 = vunpack.c.l.b16 %v531
        %v547 = vpack.c.b16 %v544, %v543
        %v548 = vpack.c.b16 %v546, %v545
        %551 = vmatprep.subr.bf16.mxu0 0
        %552 = vmatpush1.bf16.msra.mxu0 0
        %553 = vmatprep.subr.bf16.mxu0 0
        %554 = vmatpush1.bf16.msra.mxu0 0
        %555 = vmatprep.subr.bf16.mxu0 0
        %556 = vmatpush1.bf16.msra.mxu0 0
        %557 = vmatprep.subr.bf16.mxu0 0
        %558 = vmatpush1.bf16.msra.mxu0 0
        %559 = vmatprep.subr.bf16.mxu0 0
        %560 = vmatpush1.bf16.msra.mxu0 0
        %561 = vmatprep.subr.bf16.mxu0 0
        %562 = vmatpush1.bf16.msra.mxu0 0
        %563 = vmatprep.subr.bf16.mxu0 0
        %564 = vmatpush1.bf16.msra.mxu0 %v548
        %565 = vmatprep.subr.bf16.mxu0 0
        %566 = vmatpush1.bf16.msra.mxu0 %v547
        %567 = vmatprep.subr.bf16.mxu0 0
        %568 = vmatpush2.bf16.msra.mxu0 0
        %569 = vmatprep.subr.bf16.mxu0 0
        %570 = vmatpush2.bf16.msra.mxu0 0
        %571 = vmatprep.subr.bf16.mxu0 0
        %572 = vmatpush2.bf16.msra.mxu0 0
        %573 = vmatprep.subr.bf16.mxu0 0
        %574 = vmatpush2.bf16.msra.mxu0 0
        %575 = vmatprep.subr.bf16.mxu0 0
        %576 = vmatpush2.bf16.msra.mxu0 0
        %577 = vmatprep.subr.bf16.mxu0 0
        %578 = vmatpush2.bf16.msra.mxu0 0
        %579 = vmatprep.subr.bf16.mxu0 0
        %580 = vmatpush2.bf16.msra.mxu0 0
        %581 = vmatprep.subr.bf16.mxu0 0
        %582 = vmatpush2.bf16.msra.mxu0 0
        %583 = vmatprep.mubr.bf16.mxu0 0
        %584 = vmatmul.mubr.bf16.gmra.mxu0 %v486
        %v585 = vpop.f32.mrf.mxu0
        %v586 = vadd.f32 %v537, %v585
        %v587 = vpop.f32.mrf.mxu0
        %v588 = vpop.f32.mrf.mxu0
        %v589 = vpop.f32.mrf.mxu0
        %590 = vdwg.mxu0
        %v591 = vld [vmem:[%s445] sm:$0xf]
        %v592 = vld [vmem:[%s445 + $0x4] sm:$0xf]
        %v593 = vld [vmem:[%s445 + $0x8] sm:$0xf]
        %v594 = vld [vmem:[%s445 + $0xc] sm:$0xf]
        %v595 = vld [vmem:[%s454] sm:$0x1]
        %v597 = vlaneseq
        %v598 = vshrl.u32 %v597, 7
        %v599 = vsub.s32 0, %v598
        %v600 = vrot.slane %v595, %v599
        %v606 = vunpack.c.l.b16 %v591
        %v607 = vunpack.c.l.b16 %v592
        %v608 = vunpack.c.l.b16 %v593
        %v609 = vunpack.c.l.b16 %v594
        %v610 = vpack.c.b16 %v607, %v606
        %v611 = vpack.c.b16 %v609, %v608
        %614 = vmatprep.subr.bf16.mxu0 0
        %615 = vmatpush1.bf16.msra.mxu0 0
        %616 = vmatprep.subr.bf16.mxu0 0
        %617 = vmatpush1.bf16.msra.mxu0 0
        %618 = vmatprep.subr.bf16.mxu0 0
        %619 = vmatpush1.bf16.msra.mxu0 0
        %620 = vmatprep.subr.bf16.mxu0 0
        %621 = vmatpush1.bf16.msra.mxu0 0
        %622 = vmatprep.subr.bf16.mxu0 0
        %623 = vmatpush1.bf16.msra.mxu0 0
        %624 = vmatprep.subr.bf16.mxu0 0
        %625 = vmatpush1.bf16.msra.mxu0 0
        %626 = vmatprep.subr.bf16.mxu0 0
        %627 = vmatpush1.bf16.msra.mxu0 %v611
        %628 = vmatprep.subr.bf16.mxu0 0
        %629 = vmatpush1.bf16.msra.mxu0 %v610
        %630 = vmatprep.subr.bf16.mxu0 0
        %631 = vmatpush2.bf16.msra.mxu0 0
        %632 = vmatprep.subr.bf16.mxu0 0
        %633 = vmatpush2.bf16.msra.mxu0 0
        %634 = vmatprep.subr.bf16.mxu0 0
        %635 = vmatpush2.bf16.msra.mxu0 0
        %636 = vmatprep.subr.bf16.mxu0 0
        %637 = vmatpush2.bf16.msra.mxu0 0
        %638 = vmatprep.subr.bf16.mxu0 0
        %639 = vmatpush2.bf16.msra.mxu0 0
        %640 = vmatprep.subr.bf16.mxu0 0
        %641 = vmatpush2.bf16.msra.mxu0 0
        %642 = vmatprep.subr.bf16.mxu0 0
        %643 = vmatpush2.bf16.msra.mxu0 0
        %644 = vmatprep.subr.bf16.mxu0 0
        %645 = vmatpush2.bf16.msra.mxu0 0
        %646 = vmatprep.mubr.bf16.mxu0 0
        %647 = vmatmul.mubr.bf16.gmra.mxu0 %v486
        %v648 = vpop.f32.mrf.mxu0
        %v649 = vadd.f32 %v600, %v648
        %v650 = vpop.f32.mrf.mxu0
        %v651 = vpop.f32.mrf.mxu0
        %v652 = vpop.f32.mrf.mxu0
        %653 = vdwg.mxu0
        %v654 = vpack.c.bf16 %v523, %v523
        %v655 = vpack.c.bf16 %v586, %v586
        %vm656 = vcmask 64512
        %v658 = vsel %vm656, %v654, 0
        %v661 = vsel %vm656, %v655, 0
        %663 = vmatprep.subr.bf16.mxu0 0
        %664 = vmatpush1.bf16.xpose.msra.mxu0 0
        %665 = vmatprep.subr.bf16.mxu0 0
        %666 = vmatpush1.bf16.xpose.msra.mxu0 0
        %667 = vmatprep.subr.bf16.mxu0 0
        %668 = vmatpush1.bf16.xpose.msra.mxu0 0
        %669 = vmatprep.subr.bf16.mxu0 0
        %670 = vmatpush1.bf16.xpose.msra.mxu0 0
        %671 = vmatprep.subr.bf16.mxu0 0
        %672 = vmatpush1.bf16.xpose.msra.mxu0 0
        %673 = vmatprep.subr.bf16.mxu0 0
        %674 = vmatpush1.bf16.xpose.msra.mxu0 0
        %675 = vmatprep.subr.bf16.mxu0 0
        %676 = vmatpush1.bf16.xpose.msra.mxu0 0
        %677 = vmatprep.subr.bf16.mxu0 0
        %678 = vmatpush1.bf16.xpose.msra.mxu0 %v661
        %679 = vmatprep.subr.bf16.mxu0 0
        %680 = vmatpush2.bf16.xpose.msra.mxu0 0
        %681 = vmatprep.subr.bf16.mxu0 0
        %682 = vmatpush2.bf16.xpose.msra.mxu0 0
        %683 = vmatprep.subr.bf16.mxu0 0
        %684 = vmatpush2.bf16.xpose.msra.mxu0 0
        %685 = vmatprep.subr.bf16.mxu0 0
        %686 = vmatpush2.bf16.xpose.msra.mxu0 0
        %687 = vmatprep.subr.bf16.mxu0 0
        %688 = vmatpush2.bf16.xpose.msra.mxu0 0
        %689 = vmatprep.subr.bf16.mxu0 0
        %690 = vmatpush2.bf16.xpose.msra.mxu0 0
        %691 = vmatprep.subr.bf16.mxu0 0
        %692 = vmatpush2.bf16.xpose.msra.mxu0 0
        %693 = vmatprep.subr.bf16.mxu0 0
        %694 = vmatpush2.bf16.xpose.msra.mxu0 0
        %695 = vmatprep.mubr.bf16.mxu0 0
        %696 = vmatmul.mubr.bf16.gmra.mxu0 %v658
        %v697 = vpop.f32.mrf.mxu0
        %v698 = vadd.f32 0.0, %v697
        %v699 = vpop.f32.mrf.mxu0
        %v700 = vpop.f32.mrf.mxu0
        %v701 = vpop.f32.mrf.mxu0
        %702 = vdwg.mxu0
        %v703 = vsel %vm656, %v698, -inf
        %704 = vmax.xlane.f32.xlu0 %v703
        %v705 = vpop.xlane.xlu0 %704
        %v706 = vsub.f32 %v698, %v705
        %v707 = vmul.f32 %v706, 1.442695
        %v708 = vpow.pop %v707
        %v709 = vsel %vm656, %v708, 0.0
        %710 = vadd.xlane.f32.xlu0 %v709
        %v711 = vpop.xlane.xlu0 %710
        %v712 = vrcp.pop %v711
        %v713 = vmul.f32 %v708, %v712
        %v714 = vpack.c.bf16 %v713, %v713
        %v715 = vpack.c.bf16 %v649, %v649
        %v717 = vsel %vm656, %v714, 0
        %vm719 = vcmask 1043456
        %v721 = vsel %vm719, %v715, 0
        %723 = vmatprep.subr.bf16.mxu0 0
        %724 = vmatpush1.bf16.msra.mxu0 0
        %725 = vmatprep.subr.bf16.mxu0 0
        %726 = vmatpush1.bf16.msra.mxu0 0
        %727 = vmatprep.subr.bf16.mxu0 0
        %728 = vmatpush1.bf16.msra.mxu0 0
        %729 = vmatprep.subr.bf16.mxu0 0
        %730 = vmatpush1.bf16.msra.mxu0 0
        %731 = vmatprep.subr.bf16.mxu0 0
        %732 = vmatpush1.bf16.msra.mxu0 0
        %733 = vmatprep.subr.bf16.mxu0 0
        %734 = vmatpush1.bf16.msra.mxu0 0
        %735 = vmatprep.subr.bf16.mxu0 0
        %736 = vmatpush1.bf16.msra.mxu0 0
        %737 = vmatprep.subr.bf16.mxu0 0
        %738 = vmatpush1.bf16.msra.mxu0 %v721
        %739 = vmatprep.subr.bf16.mxu0 0
        %740 = vmatpush2.bf16.msra.mxu0 0
        %741 = vmatprep.subr.bf16.mxu0 0
        %742 = vmatpush2.bf16.msra.mxu0 0
        %743 = vmatprep.subr.bf16.mxu0 0
        %744 = vmatpush2.bf16.msra.mxu0 0
        %745 = vmatprep.subr.bf16.mxu0 0
        %746 = vmatpush2.bf16.msra.mxu0 0
        %747 = vmatprep.subr.bf16.mxu0 0
        %748 = vmatpush2.bf16.msra.mxu0 0
        %749 = vmatprep.subr.bf16.mxu0 0
        %750 = vmatpush2.bf16.msra.mxu0 0
        %751 = vmatprep.subr.bf16.mxu0 0
        %752 = vmatpush2.bf16.msra.mxu0 0
        %753 = vmatprep.subr.bf16.mxu0 0
        %754 = vmatpush2.bf16.msra.mxu0 0
        %755 = vmatprep.mubr.bf16.mxu0 0
        %756 = vmatmul.mubr.bf16.gmra.mxu0 %v717
        %v757 = vpop.f32.mrf.mxu0
        %v758 = vadd.f32 0.0, %v757
        %v759 = vpop.f32.mrf.mxu0
        %v760 = vpop.f32.mrf.mxu0
        %v761 = vpop.f32.mrf.mxu0
        %762 = vdwg.mxu0
        %v763 = vpack.c.bf16 %v758, %v758
        %v764 = vld [vmem:[%s458] sm:$0xf]
        %v766 = vsel %vm656, %v763, 0
        %v769 = vsel %vm719, %v764, 0
        %771 = vmatprep.subr.bf16.mxu0 0
        %772 = vmatpush1.bf16.msra.mxu0 0
        %773 = vmatprep.subr.bf16.mxu0 0
        %774 = vmatpush1.bf16.msra.mxu0 0
        %775 = vmatprep.subr.bf16.mxu0 0
        %776 = vmatpush1.bf16.msra.mxu0 0
        %777 = vmatprep.subr.bf16.mxu0 0
        %778 = vmatpush1.bf16.msra.mxu0 0
        %779 = vmatprep.subr.bf16.mxu0 0
        %780 = vmatpush1.bf16.msra.mxu0 0
        %781 = vmatprep.subr.bf16.mxu0 0
        %782 = vmatpush1.bf16.msra.mxu0 0
        %783 = vmatprep.subr.bf16.mxu0 0
        %784 = vmatpush1.bf16.msra.mxu0 0
        %785 = vmatprep.subr.bf16.mxu0 0
        %786 = vmatpush1.bf16.msra.mxu0 %v769
        %787 = vmatprep.subr.bf16.mxu0 0
        %788 = vmatpush2.bf16.msra.mxu0 0
        %789 = vmatprep.subr.bf16.mxu0 0
        %790 = vmatpush2.bf16.msra.mxu0 0
        %791 = vmatprep.subr.bf16.mxu0 0
        %792 = vmatpush2.bf16.msra.mxu0 0
        %793 = vmatprep.subr.bf16.mxu0 0
        %794 = vmatpush2.bf16.msra.mxu0 0
        %795 = vmatprep.subr.bf16.mxu0 0
        %796 = vmatpush2.bf16.msra.mxu0 0
        %797 = vmatprep.subr.bf16.mxu0 0
        %798 = vmatpush2.bf16.msra.mxu0 0
        %799 = vmatprep.subr.bf16.mxu0 0
        %800 = vmatpush2.bf16.msra.mxu0 0
        %801 = vmatprep.subr.bf16.mxu0 0
        %802 = vmatpush2.bf16.msra.mxu0 0
        %803 = vmatprep.mubr.bf16.mxu0 0
        %804 = vmatmul.mubr.bf16.gmra.mxu0 %v766
        %v805 = vpop.f32.mrf.mxu0
        %v806 = vadd.f32 0.0, %v805
        %v807 = vpop.f32.mrf.mxu0
        %v808 = vpop.f32.mrf.mxu0
        %v809 = vpop.f32.mrf.mxu0
        %810 = vdwg.mxu0
        %p811 = scmp.eq.s32.totalorder %s28, 0
        // Predicated region
        $region57: #{tpu_custom_call.1} parent=55 // pred_check
          %p812 = pneg %p811
        $region58: #{tpu_custom_call.1} parent=55 // pred_check_branch
          %814 = sbr.rel (%p812) target = $region60
        $region59: #{tpu_custom_call.1} parent=55 // pred_region
          %v815 = vld [vmem:[%s8] sm:$0x1]
          %v817 = vlaneseq
          %v818 = vshrl.u32 %v817, 7
          %v819 = vsub.s32 0, %v818
          %v820 = vrot.slane %v815, %v819
          %822 = vst.msk [vmem:[%s426] sm:$0xff] %vm484, %v820
        $region60: #{tpu_custom_call.1} parent=55 // pred_fallthru
          _
        %v823 = vld [vmem:[%s426] sm:$0xff]
        %v824 = vadd.f32 %v823, %v806
        %825 = vst.msk [vmem:[%s426] sm:$0xff] %vm484, %v824
        %s826 = sand.u32 %s272, 1
        %s827 = scalar_lea.sflag [#allocation3], %s826
        %s828 = sand.u32 %s272, 1
        %s829 = smul.addr %s828, 8
        %s830 = scalar_lea.vmem [#allocation2], %s829
        // Predicated region
        $region61: #{tpu_custom_call.1} parent=55 // pred_check
          %p831 = pneg %p282
        $region62: #{tpu_custom_call.1} parent=55 // pred_check_branch
          %833 = sbr.rel (%p831) target = $region64
        $region63: #{tpu_custom_call.1} parent=55 // pred_region
          %s835 = ssub.s32 128, 128
          %836 = vsyncadd %s827, %s835
          %s837 = smul.addr %s27, 128
          %s838 = scalar_lea.hbm %s9, %s837
          %s840 = sshll.u32 %s830, 4
          %s841 = int_to_ptr.vmem [resolvable:$true] %s840
          %843 = dma.vmem_to_hbm [thread:$0]  %s841, 128, %s838, %s827
        $region64: #{tpu_custom_call.1} parent=55 // pred_fallthru
          _
      $region56: #{tpu_custom_call.1} parent=5 // pred_fallthru
        _
      %p844 = scmp.le.s32.totalorder 2, %s18
      // Predicated region
      $region65: #{tpu_custom_call.1} parent=5 // pred_check
        %p845 = pneg %p844
      $region66: #{tpu_custom_call.1} parent=5 // pred_check_branch
        %847 = sbr.rel (%p845) target = $region68
      $region67: #{tpu_custom_call.1} parent=5 // pred_region
        %s848 = ssub.s32 %s18, 2
        // Predicated region
        $region69: #{tpu_custom_call.1} parent=67 // pred_check
          %p849 = pneg %p288
        $region70: #{tpu_custom_call.1} parent=67 // pred_check_branch
          %851 = sbr.rel (%p849) target = $region72
        $region71: #{tpu_custom_call.1} parent=67 // pred_region
          %s852 = sand.u32 %s273, 1
          %s853 = scalar_lea.sflag [#allocation3], %s852
          %s854 = sand.u32 %s273, 1
          %s855 = smul.addr %s854, 8
          %s856 = scalar_lea.vmem [#allocation2], %s855
          %857 = dma.done %s853, 128
        $region72: #{tpu_custom_call.1} parent=67 // pred_fallthru
          _
      $region68: #{tpu_custom_call.1} parent=5 // pred_fallthru
        _
    $region6: #{tpu_custom_call.1} parent=1 // loop_footer
      %s22 = sadd.s32 1, %s18
    $region7: #{tpu_custom_call.1} parent=1 // loop_footer_branch
      %17 = sbr.rel target = $region3
    $region8: #{tpu_custom_call.1} parent=1 // loop_exit
      _
    %858 = vsyncpa [#allocation3], 1
    %s859 = scalar_lea.sflag [#allocation3], 1
    %860 = vsyncpa %s859, 1

</llo_original>
